<compile_context>
chip_gen: v5e
topology: v5e:2x2
jax: 0.10.0
libtpu: 0.0.40
codegen_flags: <defaults>
</compile_context>

<pallas_src>
import functools

import jax
import jax.numpy as jnp
from jax.experimental import pallas as pl
from jax.experimental.pallas import tpu as pltpu

BN_EPS = 1e-5
LEAKY_SLOPE = 0.8


def _leaky_relu(x, slope):
    return jnp.where(x > 0, x, slope * x)


def _bn_leaky_fused(h, gamma, beta, eps, slope):
    """Training-mode BatchNorm1d (biased variance) with folded affine, fused
    with LeakyReLU. Single pass over h for the statistics; variance clamped to
    >= 0 to guard against E[x^2] - mean^2 cancellation."""
    inv_n = 1.0 / h.shape[0]
    sq = h * h
    mean = jnp.sum(h, axis=0, keepdims=True) * inv_n
    mean_sq = jnp.sum(sq, axis=0, keepdims=True) * inv_n
    var = jnp.maximum(mean_sq - mean * mean, 0.0)
    scale = gamma * jax.lax.rsqrt(var + eps)       # (1, H), rsqrt -> EUP
    shift = beta - mean * scale                    # (1, H)
    y = h * scale + shift
    return jnp.where(y > 0, y, slope * y)


def mlp_kernel(x_ref, w1_ref, w2_ref, w3_ref, vec_ref, o_ref, *, H1, H2, D_out):
    x = x_ref[...]

    g1 = vec_ref[0:1, :H1]
    be1 = vec_ref[1:2, :H1]
    g2 = vec_ref[2:3, :H2]
    be2 = vec_ref[3:4, :H2]
    b3 = vec_ref[4:5, :D_out]

    # fc1 (bias dropped: cancelled by BN mean subtraction) -> bn1 -> LeakyReLU
    h = jnp.dot(x, w1_ref[...], preferred_element_type=jnp.float32)
    h = _bn_leaky_fused(h, g1, be1, BN_EPS, LEAKY_SLOPE)

    # fc2 (bias dropped) -> bn2 -> LeakyReLU
    h = jnp.dot(h, w2_ref[...], preferred_element_type=jnp.float32)
    h = _bn_leaky_fused(h, g2, be2, BN_EPS, LEAKY_SLOPE)

    # fc3 (+ bias)
    o_ref[...] = (jnp.dot(h, w3_ref[...], preferred_element_type=jnp.float32)
                  + b3).astype(o_ref.dtype)


def init_params(key, D_in, H1, H2, D_out):
    """Mirrors nn.Linear / nn.BatchNorm1d default init. Weights stored as
    (in_features, out_features); biases / BN params as (1, features)."""
    ks = jax.random.split(key, 6)

    def linear(kw, kb, fan_in, fan_out):
        bound = 1.0 / jnp.sqrt(fan_in)
        w = jax.random.uniform(kw, (fan_in, fan_out), jnp.float32, -bound, bound)
        b = jax.random.uniform(kb, (1, fan_out), jnp.float32, -bound, bound)
        return w, b

    w1, b1 = linear(ks[0], ks[1], D_in, H1)
    w2, b2 = linear(ks[2], ks[3], H1, H2)
    w3, b3 = linear(ks[4], ks[5], H2, D_out)
    g1 = jnp.ones((1, H1), jnp.float32)
    be1 = jnp.zeros((1, H1), jnp.float32)
    g2 = jnp.ones((1, H2), jnp.float32)
    be2 = jnp.zeros((1, H2), jnp.float32)
    return (w1, b1, g1, be1, w2, b2, g2, be2, w3, b3)


def prepare_params(params):
    """One-time host-side prep: drop the fc1/fc2 biases (cancelled by
    training-mode BN) and pack the five (1, H) vectors into one (5, P) array so
    the kernel only sees 5 inputs. Weights are passed UNPADDED."""
    (w1, _b1, g1, be1, w2, _b2, g2, be2, w3, b3) = params
    H1, H2, D_out = w1.shape[1], w2.shape[1], w3.shape[1]
    P = max(H1, H2, D_out)

    def padv(v):
        return jnp.pad(v, ((0, 0), (0, P - v.shape[1])))

    vecs = jnp.concatenate(
        [padv(g1), padv(be1), padv(g2), padv(be2), padv(b3)], axis=0)  # (5, P)
    return (w1, w2, w3, vecs)


def _cost_estimate(n_batches, B, D_in, H1, H2, D_out):
    flops = 2 * n_batches * B * (D_in * H1 + H1 * H2 + H2 * D_out)
    transcendentals = n_batches * (H1 + H2)  # one rsqrt per BN feature
    bytes_accessed = 4 * (n_batches * B * (D_in + D_out)
                          + D_in * H1 + H1 * H2 + H2 * D_out
                          + 5 * max(H1, H2, D_out))
    return pl.CostEstimate(flops=flops, transcendentals=transcendentals,
                           bytes_accessed=bytes_accessed)


def nn_forward(x, prepared):
    """Single batch: x (B, D_in) -> (B, D_out). One whole-array pallas_call."""
    w1, w2, w3, vecs = prepared
    B, D_in = x.shape
    H1, H2, D_out = w1.shape[1], w2.shape[1], w3.shape[1]
    vmem = pl.BlockSpec(memory_space=pltpu.MemorySpace.VMEM)
    kern = functools.partial(mlp_kernel, H1=H1, H2=H2, D_out=D_out)
    return pl.pallas_call(
        kern,
        out_shape=jax.ShapeDtypeStruct((B, D_out), jnp.float32),
        in_specs=[vmem] * 5,
        out_specs=vmem,
        cost_estimate=_cost_estimate(1, B, D_in, H1, H2, D_out),
    )(x, w1, w2, w3, vecs)


def nn_forward_batched(x_stack, prepared):
    """Many independent batches stacked on a leading axis: (N, B, D_in) ->
    (N, B, D_out). Grid over N amortizes launch overhead + weight DMA; weights
    use constant-index blocks so they stay VMEM-resident across grid steps.
    Each grid step sees its WHOLE batch, so BatchNorm statistics remain
    full-batch (no per-tile stats bug)."""
    w1, w2, w3, vecs = prepared
    N, B, D_in = x_stack.shape
    H1, H2, D_out = w1.shape[1], w2.shape[1], w3.shape[1]
    kern = functools.partial(mlp_kernel, H1=H1, H2=H2, D_out=D_out)
    return pl.pallas_call(
        kern,
        out_shape=jax.ShapeDtypeStruct((N, B, D_out), jnp.float32),
        grid=(N,),
        in_specs=[
            pl.BlockSpec((None, B, D_in), lambda n: (n, 0, 0)),
            pl.BlockSpec((D_in, H1), lambda n: (0, 0)),   # weight-resident
            pl.BlockSpec((H1, H2), lambda n: (0, 0)),
            pl.BlockSpec((H2, D_out), lambda n: (0, 0)),
            pl.BlockSpec(vecs.shape, lambda n: (0, 0)),
        ],
        out_specs=pl.BlockSpec((None, B, D_out), lambda n: (n, 0, 0)),
        compiler_params=pltpu.CompilerParams(
            dimension_semantics=("parallel",)),  # shards over 2 TCs on v7x
        cost_estimate=_cost_estimate(N, B, D_in, H1, H2, D_out),
    )(x_stack, w1, w2, w3, vecs)


def _batchnorm_train_ref(x, gamma, beta, eps):
    mean = jnp.mean(x, axis=0, keepdims=True)
    var = jnp.mean((x - mean) * (x - mean), axis=0, keepdims=True)
    return (x - mean) * jax.lax.rsqrt(var + eps) * gamma + beta


def nn_forward_ref(x, params):
    """Straight transcription of the PyTorch forward (with biases, two-pass BN)."""
    (w1, b1, g1, be1, w2, b2, g2, be2, w3, b3) = params
    h = x @ w1 + b1
    h = _batchnorm_train_ref(h, g1, be1, BN_EPS)
    h = _leaky_relu(h, LEAKY_SLOPE)
    h = h @ w2 + b2
    h = _batchnorm_train_ref(h, g2, be2, BN_EPS)
    h = _leaky_relu(h, LEAKY_SLOPE)
    return h @ w3 + b3


if __name__ == "__main__":
    D_in, H1, H2, D_out = 32, 64, 32, 16
    B = 8     # batch per BatchNorm group
    N = 4     # independent batches for the gridded variant

    key = jax.random.PRNGKey(0)
    k_x, k_xs, k_p = jax.random.split(key, 3)
    x = jax.random.normal(k_x, (B, D_in), jnp.float32)
    x_stack = jax.random.normal(k_xs, (N, B, D_in), jnp.float32)

    params = init_params(k_p, D_in, H1, H2, D_out)
    prepared = prepare_params(params)

    # Single-batch fused kernel.
    out = jax.block_until_ready(nn_forward(x, prepared))
    ref = nn_forward_ref(x, params)
    assert out.shape == (B, D_out)
    assert jnp.allclose(out, ref, atol=1e-4, rtol=1e-4)

    # Batched (weight-resident grid) variant.
    out_b = jax.block_until_ready(nn_forward_batched(x_stack, prepared))
    ref_b = jnp.stack([nn_forward_ref(x_stack[i], params) for i in range(N)])
    assert out_b.shape == (N, B, D_out)
    assert jnp.allclose(out_b, ref_b, atol=1e-4, rtol=1e-4)

    # TODO(synk): BN running_mean/running_var buffers are not updated (pure
    # forward benchmark); emit them as extra outputs if training state is needed.
    print("KERNEL_OK")
</pallas_src>

<mosaic_0001>
module attributes {stable_mosaic.version = 11 : i64} {
  func.func @mlp_kernel(%arg0: memref<8x32xf32, #tpu.memory_space<vmem>>, %arg1: memref<32x64xf32, #tpu.memory_space<vmem>>, %arg2: memref<64x32xf32, #tpu.memory_space<vmem>>, %arg3: memref<32x16xf32, #tpu.memory_space<vmem>>, %arg4: memref<5x64xf32, #tpu.memory_space<vmem>>, %arg5: memref<8x16xf32, #tpu.memory_space<vmem>>) attributes {dimension_semantics = [], scalar_prefetch = 0 : i64, scratch_operands = 0 : i64, tpu.core_type = #tpu.core_type<tc>} {
    %c0 = arith.constant 0 : index
    %c0_0 = arith.constant 0 : index
    %0 = vector.load %arg0[%c0, %c0_0] : memref<8x32xf32, #tpu.memory_space<vmem>>, vector<8x32xf32>
    %c0_1 = arith.constant 0 : index
    %c0_2 = arith.constant 0 : index
    %1 = vector.load %arg4[%c0_1, %c0_2] : memref<5x64xf32, #tpu.memory_space<vmem>>, vector<1x64xf32>
    %c1 = arith.constant 1 : index
    %c0_3 = arith.constant 0 : index
    %2 = vector.load %arg4[%c1, %c0_3] : memref<5x64xf32, #tpu.memory_space<vmem>>, vector<1x64xf32>
    %c2 = arith.constant 2 : index
    %c0_4 = arith.constant 0 : index
    %3 = vector.load %arg4[%c2, %c0_4] : memref<5x64xf32, #tpu.memory_space<vmem>>, vector<1x32xf32>
    %c3 = arith.constant 3 : index
    %c0_5 = arith.constant 0 : index
    %4 = vector.load %arg4[%c3, %c0_5] : memref<5x64xf32, #tpu.memory_space<vmem>>, vector<1x32xf32>
    %c4 = arith.constant 4 : index
    %c0_6 = arith.constant 0 : index
    %5 = vector.load %arg4[%c4, %c0_6] : memref<5x64xf32, #tpu.memory_space<vmem>>, vector<1x16xf32>
    %c0_7 = arith.constant 0 : index
    %c0_8 = arith.constant 0 : index
    %6 = vector.load %arg1[%c0_7, %c0_8] : memref<32x64xf32, #tpu.memory_space<vmem>>, vector<32x64xf32>
    %cst = arith.constant dense<0.000000e+00> : vector<8x64xf32>
    %7 = tpu.matmul %0, %6, %cst {dimension_numbers = #tpu.dot_dimension_numbers<[1], [0], [0], [1], [0, 0, 1, 1], [], []>} : vector<8x32xf32>, vector<32x64xf32>, vector<8x64xf32> -> vector<8x64xf32>
    %8 = arith.mulf %7, %7 : vector<8x64xf32>
    %cst_9 = arith.constant dense<0.000000e+00> : vector<64xf32>
    %9 = vector.multi_reduction <add>, %7, %cst_9 [0] : vector<8x64xf32> to vector<64xf32>
    %10 = vector.shape_cast %9 : vector<64xf32> to vector<1x64xf32>
    %cst_10 = arith.constant 1.250000e-01 : f32
    %11 = vector.broadcast %cst_10 : f32 to vector<1x64xf32>
    %12 = arith.mulf %10, %11 : vector<1x64xf32>
    %cst_11 = arith.constant dense<0.000000e+00> : vector<64xf32>
    %13 = vector.multi_reduction <add>, %8, %cst_11 [0] : vector<8x64xf32> to vector<64xf32>
    %14 = vector.shape_cast %13 : vector<64xf32> to vector<1x64xf32>
    %cst_12 = arith.constant 1.250000e-01 : f32
    %15 = vector.broadcast %cst_12 : f32 to vector<1x64xf32>
    %16 = arith.mulf %14, %15 : vector<1x64xf32>
    %17 = arith.mulf %12, %12 : vector<1x64xf32>
    %18 = arith.subf %16, %17 : vector<1x64xf32>
    %cst_13 = arith.constant 0.000000e+00 : f32
    %19 = vector.broadcast %cst_13 : f32 to vector<1x64xf32>
    %20 = arith.maximumf %18, %19 : vector<1x64xf32>
    %cst_14 = arith.constant 9.99999974E-6 : f32
    %21 = vector.broadcast %cst_14 : f32 to vector<1x64xf32>
    %22 = arith.addf %20, %21 : vector<1x64xf32>
    %23 = math.rsqrt %22 : vector<1x64xf32>
    %24 = arith.mulf %1, %23 : vector<1x64xf32>
    %25 = arith.mulf %12, %24 : vector<1x64xf32>
    %26 = arith.subf %2, %25 : vector<1x64xf32>
    %27 = vector.broadcast %24 : vector<1x64xf32> to vector<8x64xf32>
    %28 = arith.mulf %7, %27 : vector<8x64xf32>
    %29 = vector.broadcast %26 : vector<1x64xf32> to vector<8x64xf32>
    %30 = arith.addf %28, %29 : vector<8x64xf32>
    %cst_15 = arith.constant 0.000000e+00 : f32
    %31 = vector.broadcast %cst_15 : f32 to vector<8x64xf32>
    %32 = arith.cmpf ogt, %30, %31 : vector<8x64xf32>
    %cst_16 = arith.constant 8.000000e-01 : f32
    %33 = vector.broadcast %cst_16 : f32 to vector<8x64xf32>
    %34 = arith.mulf %33, %30 : vector<8x64xf32>
    %35 = arith.select %32, %30, %34 : vector<8x64xi1>, vector<8x64xf32>
    %c0_17 = arith.constant 0 : index
    %c0_18 = arith.constant 0 : index
    %36 = vector.load %arg2[%c0_17, %c0_18] : memref<64x32xf32, #tpu.memory_space<vmem>>, vector<64x32xf32>
    %cst_19 = arith.constant dense<0.000000e+00> : vector<8x32xf32>
    %37 = tpu.matmul %35, %36, %cst_19 {dimension_numbers = #tpu.dot_dimension_numbers<[1], [0], [0], [1], [0, 0, 1, 1], [], []>} : vector<8x64xf32>, vector<64x32xf32>, vector<8x32xf32> -> vector<8x32xf32>
    %38 = arith.mulf %37, %37 : vector<8x32xf32>
    %cst_20 = arith.constant dense<0.000000e+00> : vector<32xf32>
    %39 = vector.multi_reduction <add>, %37, %cst_20 [0] : vector<8x32xf32> to vector<32xf32>
    %40 = vector.shape_cast %39 : vector<32xf32> to vector<1x32xf32>
    %cst_21 = arith.constant 1.250000e-01 : f32
    %41 = vector.broadcast %cst_21 : f32 to vector<1x32xf32>
    %42 = arith.mulf %40, %41 : vector<1x32xf32>
    %cst_22 = arith.constant dense<0.000000e+00> : vector<32xf32>
    %43 = vector.multi_reduction <add>, %38, %cst_22 [0] : vector<8x32xf32> to vector<32xf32>
    %44 = vector.shape_cast %43 : vector<32xf32> to vector<1x32xf32>
    %cst_23 = arith.constant 1.250000e-01 : f32
    %45 = vector.broadcast %cst_23 : f32 to vector<1x32xf32>
    %46 = arith.mulf %44, %45 : vector<1x32xf32>
    %47 = arith.mulf %42, %42 : vector<1x32xf32>
    %48 = arith.subf %46, %47 : vector<1x32xf32>
    %cst_24 = arith.constant 0.000000e+00 : f32
    %49 = vector.broadcast %cst_24 : f32 to vector<1x32xf32>
    %50 = arith.maximumf %48, %49 : vector<1x32xf32>
    %cst_25 = arith.constant 9.99999974E-6 : f32
    %51 = vector.broadcast %cst_25 : f32 to vector<1x32xf32>
    %52 = arith.addf %50, %51 : vector<1x32xf32>
    %53 = math.rsqrt %52 : vector<1x32xf32>
    %54 = arith.mulf %3, %53 : vector<1x32xf32>
    %55 = arith.mulf %42, %54 : vector<1x32xf32>
    %56 = arith.subf %4, %55 : vector<1x32xf32>
    %57 = vector.broadcast %54 : vector<1x32xf32> to vector<8x32xf32>
    %58 = arith.mulf %37, %57 : vector<8x32xf32>
    %59 = vector.broadcast %56 : vector<1x32xf32> to vector<8x32xf32>
    %60 = arith.addf %58, %59 : vector<8x32xf32>
    %cst_26 = arith.constant 0.000000e+00 : f32
    %61 = vector.broadcast %cst_26 : f32 to vector<8x32xf32>
    %62 = arith.cmpf ogt, %60, %61 : vector<8x32xf32>
    %cst_27 = arith.constant 8.000000e-01 : f32
    %63 = vector.broadcast %cst_27 : f32 to vector<8x32xf32>
    %64 = arith.mulf %63, %60 : vector<8x32xf32>
    %65 = arith.select %62, %60, %64 : vector<8x32xi1>, vector<8x32xf32>
    %c0_28 = arith.constant 0 : index
    %c0_29 = arith.constant 0 : index
    %66 = vector.load %arg3[%c0_28, %c0_29] : memref<32x16xf32, #tpu.memory_space<vmem>>, vector<32x16xf32>
    %cst_30 = arith.constant dense<0.000000e+00> : vector<8x16xf32>
    %67 = tpu.matmul %65, %66, %cst_30 {dimension_numbers = #tpu.dot_dimension_numbers<[1], [0], [0], [1], [0, 0, 1, 1], [], []>} : vector<8x32xf32>, vector<32x16xf32>, vector<8x16xf32> -> vector<8x16xf32>
    %68 = vector.broadcast %5 : vector<1x16xf32> to vector<8x16xf32>
    %69 = arith.addf %67, %68 : vector<8x16xf32>
    %c0_31 = arith.constant 0 : index
    %c0_32 = arith.constant 0 : index
    %70 = vector.load %arg5[%c0_31, %c0_32] : memref<8x16xf32, #tpu.memory_space<vmem>>, vector<8x16xf32>
    tpu.vector_store %arg5[%c0_31, %c0_32], %69 {strides = array<i32>} : memref<8x16xf32, #tpu.memory_space<vmem>>, vector<8x16xf32>,
    return
  }
}

</mosaic_0001>

<llo_original>
// kernel: tpu_custom_call.1
$region0: #{tpu_custom_call.1}
  #allocation0 [shape = 'u32[]', space=smem, size = 0x4, offset = 0x4, fixed_abs, tag = 'smem constant byte address 0x4 - core index']
  #allocation1 [shape = 'u32[72,128]{1,0:T(1,128)}', space=vmem, size = 0x9000, scoped, tag = 'internal scratch']
  %s0 = inlined_call_operand.vmem [shape: f32[8,32], index: 0, kind: input, shape index: {}]
  %s1 = inlined_call_operand.vmem [shape: f32[32,64], index: 1, kind: input, shape index: {}]
  %s2 = inlined_call_operand.vmem [shape: f32[64,32], index: 2, kind: input, shape index: {}]
  %s3 = inlined_call_operand.vmem [shape: f32[32,16], index: 3, kind: input, shape index: {}]
  %s4 = inlined_call_operand.vmem [shape: f32[5,64], index: 4, kind: input, shape index: {}]
  %s5 = inlined_call_operand.hbm [shape: f32[8,16], index: 5, kind: output, shape index: {}]
  %s6 = sld [smem:[#allocation0]]
  $region30: #{tpu_custom_call.1} parent=0
    _
  %s8 = ssub.s32 1, %s6
  %s9 = scalar_select 0, %s8, %s6
  $region1: #{tpu_custom_call.1} parent=0
    #allocation2 [shape = 'u8[4096]{0}', space=vmem, size = 0x1000, scoped, tag = 'output window, operand 0, single buffered']
    #allocation3 [shape = 's32[1]{0}', space=sflag, size = 0x4, scoped, tag = 'scoped memory for tpu_custom_call.1']
    %10 = vsyncpa [#allocation3], 0
    // Predicated region
    $region2: #{tpu_custom_call.1} parent=1 // pred_check
      _
    $region3: #{tpu_custom_call.1} parent=1 // pred_check_branch
      %12 = sbr.rel (0) target = $region5
    $region4: #{tpu_custom_call.1} parent=1 // pred_region
      _
    $region5: #{tpu_custom_call.1} parent=1 // pred_fallthru
      _
    // Predicated region
    $region6: #{tpu_custom_call.1} parent=1 // pred_check
      _
    $region7: #{tpu_custom_call.1} parent=1 // pred_check_branch
      %14 = sbr.rel (0) target = $region9
    $region8: #{tpu_custom_call.1} parent=1 // pred_region
      _
    $region9: #{tpu_custom_call.1} parent=1 // pred_fallthru
      _
    // Predicated region
    $region10: #{tpu_custom_call.1} parent=1 // pred_check
      _
    $region11: #{tpu_custom_call.1} parent=1 // pred_check_branch
      %16 = sbr.rel (0) target = $region13
    $region12: #{tpu_custom_call.1} parent=1 // pred_region
      _
    $region13: #{tpu_custom_call.1} parent=1 // pred_fallthru
      _
    // Predicated region
    $region14: #{tpu_custom_call.1} parent=1 // pred_check
      _
    $region15: #{tpu_custom_call.1} parent=1 // pred_check_branch
      %18 = sbr.rel (0) target = $region17
    $region16: #{tpu_custom_call.1} parent=1 // pred_region
      _
    $region17: #{tpu_custom_call.1} parent=1 // pred_fallthru
      _
    // Predicated region
    $region18: #{tpu_custom_call.1} parent=1 // pred_check
      _
    $region19: #{tpu_custom_call.1} parent=1 // pred_check_branch
      %20 = sbr.rel (0) target = $region21
    $region20: #{tpu_custom_call.1} parent=1 // pred_region
      _
    $region21: #{tpu_custom_call.1} parent=1 // pred_fallthru
      _
    %v21 = vld [vmem:[%s0] sm:$0xff]
    %v22 = vld [vmem:[%s4] sm:$0x1]
    %v23 = vld [vmem:[%s4 + $0x1] sm:$0x1]
    %v24 = vld [vmem:[%s4 + $0x2] sm:$0x1]
    %v25 = vld [vmem:[%s4 + $0x3] sm:$0x1]
    %v26 = vld [vmem:[%s4 + $0x4] sm:$0x1]
    %v27 = vld [vmem:[%s1] sm:$0xff]
    %v28 = vld [vmem:[%s1 + $0x8] sm:$0xff]
    %v29 = vld [vmem:[%s1 + $0x10] sm:$0xff]
    %v30 = vld [vmem:[%s1 + $0x18] sm:$0xff]
    %vm31 = vcmask 261120
    %v33 = vsel %vm31, %v21, 0
    %35 = vmatpush.msra.mxu0 0.0
    %36 = vmatpush.msra.mxu0 0.0
    %37 = vmatpush.msra.mxu0 0.0
    %38 = vmatpush.msra.mxu0 0.0
    %39 = vmatpush.msra.mxu0 0.0
    %40 = vmatpush.msra.mxu0 0.0
    %41 = vmatpush.msra.mxu0 0.0
    %42 = vmatpush.msra.mxu0 0.0
    %43 = vmatpush.msra.mxu0 0.0
    %44 = vmatpush.msra.mxu0 0.0
    %45 = vmatpush.msra.mxu0 0.0
    %46 = vmatpush.msra.mxu0 0.0
    %47 = vmatpush.msra.mxu0 %v30
    %48 = vmatpush.msra.mxu0 %v29
    %49 = vmatpush.msra.mxu0 %v28
    %50 = vmatpush.msra.mxu0 %v27
    %51 = vmatmul.f32.gmra.mxu0 %v33
    %v52 = vpop.f32.mrf.mxu0
    %v53 = vadd.f32 0.0, %v52
    %54 = vdwg.mxu0
    %v55 = vmul.f32 %v53, %v53
    %vm56 = vcmask 523264
    %v57 = vsel %vm56, %v53, 0.0
    %v58 = vrot.slane %v57, 4
    %v59 = vadd.f32 %v57, %v58
    %v60 = vrot.slane %v59, 2
    %v61 = vadd.f32 %v59, %v60
    %v62 = vrot.slane %v61, 1
    %v63 = vadd.f32 %v61, %v62
    %v64 = vmul.f32 %v63, 0.125
    %v65 = vsel %vm56, %v55, 0.0
    %v66 = vrot.slane %v65, 4
    %v67 = vadd.f32 %v65, %v66
    %v68 = vrot.slane %v67, 2
    %v69 = vadd.f32 %v67, %v68
    %v70 = vrot.slane %v69, 1
    %v71 = vadd.f32 %v69, %v70
    %v72 = vmul.f32 %v71, 0.125
    %v73 = vmul.f32 %v64, %v64
    %v74 = vsub.f32 %v72, %v73
    %v75 = vmax.f32 %v74, 0.0
    %v76 = vadd.f32 %v75, 1e-05
    %v77 = vrsqrt.pop %v76
    %v78 = vmul.f32 %v77, %v76
    %v79 = vmul.f32 %v78, %v77
    %v80 = vmul.f32 0.5, %v79
    %v81 = vsub.f32 1.5, %v80
    %v82 = vmul.f32 %v77, %v81
    %vm83 = vweird.f32 %v76
    %vm84 = vweird.f32 %v77
    %vm85 = vmor %vm83, %vm84
    %v86 = vsel %vm85, %v77, %v82
    %v87 = vmul.f32 %v22, %v86
    %v88 = vmul.f32 %v64, %v87
    %v89 = vsub.f32 %v23, %v88
    %v90 = vperm.slane %v87, 0
    %v91 = vmul.f32 %v53, %v90
    %v92 = vperm.slane %v89, 0
    %v93 = vadd.f32 %v91, %v92
    %vm94 = vcmp.gt.f32.partialorder %v93, 0.0
    %v95 = vmul.f32 %v93, 0.8
    %v96 = vsel %vm94, %v93, %v95
    %v97 = vld [vmem:[%s2] sm:$0xff]
    %v98 = vld [vmem:[%s2 + $0x8] sm:$0xff]
    %v99 = vld [vmem:[%s2 + $0x10] sm:$0xff]
    %v100 = vld [vmem:[%s2 + $0x18] sm:$0xff]
    %v101 = vld [vmem:[%s2 + $0x20] sm:$0xff]
    %v102 = vld [vmem:[%s2 + $0x28] sm:$0xff]
    %v103 = vld [vmem:[%s2 + $0x30] sm:$0xff]
    %v104 = vld [vmem:[%s2 + $0x38] sm:$0xff]
    %v106 = vsel %vm56, %v96, 0
    %108 = vmatpush.msra.mxu0 0.0
    %109 = vmatpush.msra.mxu0 0.0
    %110 = vmatpush.msra.mxu0 0.0
    %111 = vmatpush.msra.mxu0 0.0
    %112 = vmatpush.msra.mxu0 0.0
    %113 = vmatpush.msra.mxu0 0.0
    %114 = vmatpush.msra.mxu0 0.0
    %115 = vmatpush.msra.mxu0 0.0
    %116 = vmatpush.msra.mxu0 %v104
    %117 = vmatpush.msra.mxu0 %v103
    %118 = vmatpush.msra.mxu0 %v102
    %119 = vmatpush.msra.mxu0 %v101
    %120 = vmatpush.msra.mxu0 %v100
    %121 = vmatpush.msra.mxu0 %v99
    %122 = vmatpush.msra.mxu0 %v98
    %123 = vmatpush.msra.mxu0 %v97
    %124 = vmatmul.f32.gmra.mxu0 %v106
    %v125 = vpop.f32.mrf.mxu0
    %v126 = vadd.f32 0.0, %v125
    %127 = vdwg.mxu0
    %v128 = vmul.f32 %v126, %v126
    %v129 = vsel %vm31, %v126, 0.0
    %v130 = vrot.slane %v129, 4
    %v131 = vadd.f32 %v129, %v130
    %v132 = vrot.slane %v131, 2
    %v133 = vadd.f32 %v131, %v132
    %v134 = vrot.slane %v133, 1
    %v135 = vadd.f32 %v133, %v134
    %v136 = vmul.f32 %v135, 0.125
    %v137 = vsel %vm31, %v128, 0.0
    %v138 = vrot.slane %v137, 4
    %v139 = vadd.f32 %v137, %v138
    %v140 = vrot.slane %v139, 2
    %v141 = vadd.f32 %v139, %v140
    %v142 = vrot.slane %v141, 1
    %v143 = vadd.f32 %v141, %v142
    %v144 = vmul.f32 %v143, 0.125
    %v145 = vmul.f32 %v136, %v136
    %v146 = vsub.f32 %v144, %v145
    %v147 = vmax.f32 %v146, 0.0
    %v148 = vadd.f32 %v147, 1e-05
    %v149 = vrsqrt.pop %v148
    %v150 = vmul.f32 %v149, %v148
    %v151 = vmul.f32 %v150, %v149
    %v152 = vmul.f32 0.5, %v151
    %v153 = vsub.f32 1.5, %v152
    %v154 = vmul.f32 %v149, %v153
    %vm155 = vweird.f32 %v148
    %vm156 = vweird.f32 %v149
    %vm157 = vmor %vm155, %vm156
    %v158 = vsel %vm157, %v149, %v154
    %v159 = vmul.f32 %v24, %v158
    %v160 = vmul.f32 %v136, %v159
    %v161 = vsub.f32 %v25, %v160
    %v162 = vperm.slane %v159, 0
    %v163 = vmul.f32 %v126, %v162
    %v164 = vperm.slane %v161, 0
    %v165 = vadd.f32 %v163, %v164
    %vm166 = vcmp.gt.f32.partialorder %v165, 0.0
    %v167 = vmul.f32 %v165, 0.8
    %v168 = vsel %vm166, %v165, %v167
    %v169 = vld [vmem:[%s3] sm:$0xff]
    %v170 = vld [vmem:[%s3 + $0x8] sm:$0xff]
    %v171 = vld [vmem:[%s3 + $0x10] sm:$0xff]
    %v172 = vld [vmem:[%s3 + $0x18] sm:$0xff]
    %v173 = vperm.slane %v26, 0
    %v175 = vsel %vm31, %v168, 0
    %177 = vmatpush.msra.mxu0 0.0
    %178 = vmatpush.msra.mxu0 0.0
    %179 = vmatpush.msra.mxu0 0.0
    %180 = vmatpush.msra.mxu0 0.0
    %181 = vmatpush.msra.mxu0 0.0
    %182 = vmatpush.msra.mxu0 0.0
    %183 = vmatpush.msra.mxu0 0.0
    %184 = vmatpush.msra.mxu0 0.0
    %185 = vmatpush.msra.mxu0 0.0
    %186 = vmatpush.msra.mxu0 0.0
    %187 = vmatpush.msra.mxu0 0.0
    %188 = vmatpush.msra.mxu0 0.0
    %189 = vmatpush.msra.mxu0 %v172
    %190 = vmatpush.msra.mxu0 %v171
    %191 = vmatpush.msra.mxu0 %v170
    %192 = vmatpush.msra.mxu0 %v169
    %193 = vmatmul.f32.gmra.mxu0 %v175
    %v194 = vpop.f32.mrf.mxu0
    %v195 = vadd.f32 %v173, %v194
    %196 = vdwg.mxu0
    %vm197 = vcmask 130048
    %198 = vst.msk [vmem:[#allocation2] sm:$0xff] %vm197, %v195
    // Predicated region
    $region22: #{tpu_custom_call.1} parent=1 // pred_check
      _
    $region23: #{tpu_custom_call.1} parent=1 // pred_check_branch
      %200 = sbr.rel (0) target = $region25
    $region24: #{tpu_custom_call.1} parent=1 // pred_region
      %202 = vsyncadd [#allocation3], 0
      %s204 = sshll.u32 [#allocation2], 4
      %s205 = int_to_ptr.vmem [resolvable:$true] %s204
      %s206 = sshll.u32 %s5, 4
      %s207 = int_to_ptr.hbm [resolvable:$true] %s206
      %209 = dma.vmem_to_hbm [thread:$0]  %s205, 128, %s207, [#allocation3]
    $region25: #{tpu_custom_call.1} parent=1 // pred_fallthru
      _
    // Predicated region
    $region26: #{tpu_custom_call.1} parent=1 // pred_check
      _
    $region27: #{tpu_custom_call.1} parent=1 // pred_check_branch
      %211 = sbr.rel (0) target = $region29
    $region28: #{tpu_custom_call.1} parent=1 // pred_region
      %213 = dma.done [#allocation3], 128
    $region29: #{tpu_custom_call.1} parent=1 // pred_fallthru
      _
    %214 = vsyncpa [#allocation3], 1

</llo_original>
